<compile_context>
chip_gen: v7x
topology: tpu7x:2x2x1
jax: 0.10.0
libtpu: 0.0.40
codegen_flags: <defaults>
</compile_context>

<pallas_src>
import jax
import jax.numpy as jnp
import numpy as np
from jax.experimental import pallas as pl
from jax.experimental.pallas import tpu as pltpu


# ---------------------------------------------------------------------------
# Fused kernel: per-row meta-net MLP + prompt assembly for one (class-tile, b)
# output block per grid step.
# ---------------------------------------------------------------------------
def _cocoop_kernel(im_ref, w1_ref, b1_ref, w2_ref, b2_ref, ctx_ref,
                   prefix_ref, suffix_ref, out_ref):
    # im_ref     : (B, embed_dim)            resident across the whole grid
    # w1/b1/w2/b2: meta-net params           resident
    # ctx_ref    : (n_ctx, d_ctx)            resident
    # prefix_ref : (TILE_CLS, 1, d_ctx)      resident across the inner batch axis
    # suffix_ref : (TILE_CLS, suf_len, d_ctx)
    # out_ref    : (1, TILE_CLS, seq_len, d_ctx)
    b = pl.program_id(1)
    n_ctx, d_ctx = ctx_ref.shape
    tile_cls = prefix_ref.shape[0]

    # meta_net(im_features[b]) -- tiny, recomputed per step from resident VMEM
    # inputs; cost is negligible and hidden under the output DMA.
    im_b = im_ref[pl.ds(b, 1), :]                                   # (1, embed_dim)
    h = jnp.dot(im_b, w1_ref[...], preferred_element_type=jnp.float32)
    h = jnp.maximum(h + b1_ref[...].astype(jnp.float32), 0.0)       # (1, hidden), f32
    bias = jnp.dot(h, w2_ref[...].astype(jnp.float32),
                   preferred_element_type=jnp.float32)
    bias = bias + b2_ref[...].astype(jnp.float32)                   # (1, d_ctx), f32

    # ctx_shifted = ctx + bias[b]  (f32 accumulate, single cast at the store)
    ctx_shifted = (ctx_ref[...].astype(jnp.float32) + bias).astype(out_ref.dtype)

    # Direct slice stores -- no concatenate temporary, lane dim stays dense.
    # (Masked sublane stores here are hidden under the HBM-write-bound output DMA.)
    out_ref[0, :, 0:1, :] = prefix_ref[...].astype(out_ref.dtype)
    out_ref[0, :, 1:1 + n_ctx, :] = jnp.broadcast_to(
        ctx_shifted[None], (tile_cls, n_ctx, d_ctx))
    out_ref[0, :, 1 + n_ctx:, :] = suffix_ref[...].astype(out_ref.dtype)


def cocoop_prompt_learner_forward(im_features, params, *, tile_cls=None,
                                  out_dtype=None):
    """Pallas forward: returns prompts of shape (B, n_cls, seq_len, ctx_dim)."""
    B, embed_dim = im_features.shape
    n_cls, _, d_ctx = params["token_prefix"].shape
    n_ctx = params["ctx"].shape[0]
    suf_len = params["token_suffix"].shape[1]
    seq_len = 1 + n_ctx + suf_len
    hidden = params["w1"].shape[1]
    if out_dtype is None:
        out_dtype = params["token_prefix"].dtype        # module dtype (bf16 in prod)
    itemsize = jnp.dtype(out_dtype).itemsize

    # --- class-tile sizing: biggest tile whose double-buffered out+suffix+prefix
    #     blocks stay under ~24 MiB (fits every generation once vmem_limit is set).
    if tile_cls is None:
        per_cls = 2 * (seq_len + suf_len + 1) * d_ctx * itemsize   # dbl-buffered bytes / class row
        budget = 24 * 1024 * 1024
        tile_cls = max(1, min(n_cls, budget // per_cls))
        if tile_cls > 8:
            tile_cls -= tile_cls % 8                               # sublane-friendly
        if B == 1 and n_cls > tile_cls:
            # v7x megacore: prefer an even class-tile count so both TensorCores
            # get the same number of ~MB output blocks.
            nt = pl.cdiv(n_cls, tile_cls)
            if nt % 2 == 1:
                tile_cls = max(1, pl.cdiv(n_cls, nt + 1))
    n_cls_tiles = pl.cdiv(n_cls, tile_cls)

    # --- explicit scoped-VMEM limit (v5e default is only 16 MiB; cap below v7x's
    #     64 MiB physical).  Big blocks are double-buffered by Pallas.
    param_isize = jnp.dtype(params["token_prefix"].dtype).itemsize
    blk_bytes = tile_cls * (seq_len + suf_len + 1) * d_ctx * max(itemsize, param_isize)
    res_bytes = 4 * (B * embed_dim + embed_dim * hidden + hidden
                     + hidden * d_ctx + d_ctx + n_ctx * d_ctx)
    vmem_limit = int(min(max(2 * blk_bytes + 2 * res_bytes + (8 << 20), 32 << 20),
                         56 << 20))

    out_bytes = B * n_cls * seq_len * d_ctx * itemsize
    in_bytes = (n_cls * (1 + suf_len) * d_ctx * param_isize
                + (n_ctx * d_ctx + B * embed_dim + embed_dim * hidden
                   + hidden * d_ctx + hidden + d_ctx) * param_isize)
    cost = pl.CostEstimate(
        flops=2 * B * n_cls_tiles * (embed_dim * hidden + hidden * d_ctx)
              + B * n_cls * n_ctx * d_ctx,
        transcendentals=0,
        bytes_accessed=out_bytes + in_bytes)

    grid = (n_cls_tiles, B)   # class-tile outer, batch inner (prefix/suffix residency)

    return pl.pallas_call(
        _cocoop_kernel,
        out_shape=jax.ShapeDtypeStruct((B, n_cls, seq_len, d_ctx), out_dtype),
        grid=grid,
        in_specs=[
            pl.BlockSpec((B, embed_dim), lambda j, b: (0, 0)),                 # im_features
            pl.BlockSpec((embed_dim, hidden), lambda j, b: (0, 0)),            # w1
            pl.BlockSpec((1, hidden), lambda j, b: (0, 0)),                    # b1
            pl.BlockSpec((hidden, d_ctx), lambda j, b: (0, 0)),                # w2
            pl.BlockSpec((1, d_ctx), lambda j, b: (0, 0)),                     # b2
            pl.BlockSpec((n_ctx, d_ctx), lambda j, b: (0, 0)),                 # ctx
            pl.BlockSpec((tile_cls, 1, d_ctx), lambda j, b: (j, 0, 0)),        # prefix
            pl.BlockSpec((tile_cls, suf_len, d_ctx), lambda j, b: (j, 0, 0)),  # suffix
        ],
        out_specs=pl.BlockSpec((1, tile_cls, seq_len, d_ctx),
                               lambda j, b: (b, j, 0, 0)),
        compiler_params=pltpu.CompilerParams(
            dimension_semantics=("parallel", "parallel"),
            vmem_limit_bytes=vmem_limit),
        cost_estimate=cost,
    )(im_features, params["w1"], params["b1"], params["w2"], params["b2"],
      params["ctx"], params["token_prefix"], params["token_suffix"])


# ---------------------------------------------------------------------------
# Pure-JAX reference mirroring the PyTorch module (f32 accumulation, cast at end).
# Note: with bf16 params this matches the kernel (which also accumulates in f32);
# a bf16 PyTorch run that accumulates in low precision would differ slightly.
# ---------------------------------------------------------------------------
def _reference_forward(im_features, p, out_dtype=None):
    if out_dtype is None:
        out_dtype = p["token_prefix"].dtype
    f32 = jnp.float32
    x = im_features.astype(f32)
    h = jnp.maximum(x @ p["w1"].astype(f32) + p["b1"].astype(f32), 0.0)
    bias = h @ p["w2"].astype(f32) + p["b2"].astype(f32)                  # (B, Dc)
    ctx_shifted = p["ctx"].astype(f32)[None, :, :] + bias[:, None, :]     # (B, n_ctx, Dc)
    n_cls = p["token_prefix"].shape[0]
    prefix = p["token_prefix"].astype(f32)
    suffix = p["token_suffix"].astype(f32)
    prompts = []
    for b in range(im_features.shape[0]):
        ctx_i = jnp.broadcast_to(ctx_shifted[b][None],
                                 (n_cls,) + ctx_shifted.shape[1:])
        prompts.append(jnp.concatenate([prefix, ctx_i, suffix], axis=1))
    return jnp.stack(prompts).astype(out_dtype)


def make_params(key, *, n_cls, n_ctx, ctx_dim, embed_dim, seq_len,
                dtype=jnp.float32):
    hidden = max(embed_dim // 16, 1)
    ks = jax.random.split(key, 8)
    suf_len = seq_len - 1 - n_ctx
    return {
        # meta_net: Linear(embed_dim, embed_dim//16) -> ReLU -> Linear(embed_dim//16, ctx_dim)
        "w1": jax.random.normal(ks[0], (embed_dim, hidden), dtype) * 0.02,
        "b1": jax.random.normal(ks[5], (1, hidden), dtype) * 0.01,
        "w2": jax.random.normal(ks[1], (hidden, ctx_dim), dtype) * 0.02,
        "b2": jax.random.normal(ks[6], (1, ctx_dim), dtype) * 0.01,
        # learnable context vectors (ctx_init embedding stand-in)
        "ctx": jax.random.normal(ks[2], (n_ctx, ctx_dim), dtype) * 0.02,
        # frozen token-embedding buffers (SOS prefix, class-name + EOS suffix)
        "token_prefix": jax.random.normal(ks[3], (n_cls, 1, ctx_dim), dtype),
        "token_suffix": jax.random.normal(ks[4], (n_cls, suf_len, ctx_dim), dtype),
    }


if __name__ == "__main__":
    key = jax.random.PRNGKey(0)
    k_par, k_im = jax.random.split(key)

    # Small shapes consistent with the module's forward.
    B, n_cls, n_ctx = 2, 6, 4
    embed_dim, ctx_dim, seq_len = 128, 128, 16

    # --- Case 1: f32 params/prompts, explicit tile_cls=4 so n_cls=6 exercises a
    #     partial class tile (tight tolerance).
    p32 = make_params(k_par, n_cls=n_cls, n_ctx=n_ctx, ctx_dim=ctx_dim,
                      embed_dim=embed_dim, seq_len=seq_len, dtype=jnp.float32)
    im32 = jax.random.normal(k_im, (B, embed_dim), jnp.float32)
    out32 = jax.block_until_ready(
        cocoop_prompt_learner_forward(im32, p32, tile_cls=4))
    ref32 = _reference_forward(im32, p32)
    assert out32.shape == (B, n_cls, seq_len, ctx_dim), out32.shape
    np.testing.assert_allclose(np.asarray(out32), np.asarray(ref32),
                               rtol=1e-5, atol=1e-5)

    # --- Case 2: bf16 frozen buffers + bf16 prompts (the bandwidth-optimal
    #     production path; bias add still accumulated in f32 inside the kernel).
    p16 = jax.tree_util.tree_map(lambda a: a.astype(jnp.bfloat16), p32)
    im16 = im32.astype(jnp.bfloat16)
    out16 = jax.block_until_ready(cocoop_prompt_learner_forward(im16, p16))
    ref16 = _reference_forward(im16, p16)
    assert out16.dtype == jnp.bfloat16
    assert out16.shape == (B, n_cls, seq_len, ctx_dim), out16.shape
    np.testing.assert_allclose(np.asarray(out16.astype(jnp.float32)),
                               np.asarray(ref16.astype(jnp.float32)),
                               rtol=2e-2, atol=2e-2)

    print("KERNEL_OK")
</pallas_src>

<mosaic_0001>
module attributes {stable_mosaic.version = 11 : i64} {
  func.func @_cocoop_kernel(%arg0: i32, %arg1: i32, %arg2: memref<2x128xf32, #tpu.memory_space<vmem>>, %arg3: memref<128x8xf32, #tpu.memory_space<vmem>>, %arg4: memref<1x8xf32, #tpu.memory_space<vmem>>, %arg5: memref<8x128xf32, #tpu.memory_space<vmem>>, %arg6: memref<1x128xf32, #tpu.memory_space<vmem>>, %arg7: memref<4x128xf32, #tpu.memory_space<vmem>>, %arg8: memref<4x1x128xf32, #tpu.memory_space<vmem>>, %arg9: memref<4x11x128xf32, #tpu.memory_space<vmem>>, %arg10: memref<1x4x16x128xf32, #tpu.memory_space<vmem>>) attributes {dimension_semantics = [#tpu.dimension_semantics<parallel>, #tpu.dimension_semantics<parallel>], iteration_bounds = array<i64: 2, 2>, scalar_prefetch = 0 : i64, scratch_operands = 0 : i64, tpu.core_type = #tpu.core_type<tc>, window_params = [{pipeline_mode = #tpu.pipeline_mode<synchronous>, transform_indices = @transform_0, window_bounds = array<i64: 2, 128>}, {pipeline_mode = #tpu.pipeline_mode<synchronous>, transform_indices = @transform_1, window_bounds = array<i64: 128, 8>}, {pipeline_mode = #tpu.pipeline_mode<synchronous>, transform_indices = @transform_2, window_bounds = array<i64: 1, 8>}, {pipeline_mode = #tpu.pipeline_mode<synchronous>, transform_indices = @transform_3, window_bounds = array<i64: 8, 128>}, {pipeline_mode = #tpu.pipeline_mode<synchronous>, transform_indices = @transform_4, window_bounds = array<i64: 1, 128>}, {pipeline_mode = #tpu.pipeline_mode<synchronous>, transform_indices = @transform_5, window_bounds = array<i64: 4, 128>}, {transform_indices = @transform_6, window_bounds = array<i64: 4, 1, 128>}, {transform_indices = @transform_7, window_bounds = array<i64: 4, 11, 128>}, {transform_indices = @transform_8, window_bounds = array<i64: 1, 4, 16, 128>}]} {
    %0 = arith.index_cast %arg1 : i32 to index
    %c0 = arith.constant 0 : index
    %1 = vector.load %arg2[%0, %c0] : memref<2x128xf32, #tpu.memory_space<vmem>>, vector<1x128xf32>
    %c0_0 = arith.constant 0 : index
    %c0_1 = arith.constant 0 : index
    %2 = vector.load %arg3[%c0_0, %c0_1] : memref<128x8xf32, #tpu.memory_space<vmem>>, vector<128x8xf32>
    %cst = arith.constant dense<0.000000e+00> : vector<1x8xf32>
    %3 = tpu.matmul %1, %2, %cst {dimension_numbers = #tpu.dot_dimension_numbers<[1], [0], [0], [1], [0, 0, 1, 1], [], []>} : vector<1x128xf32>, vector<128x8xf32>, vector<1x8xf32> -> vector<1x8xf32>
    %c0_2 = arith.constant 0 : index
    %c0_3 = arith.constant 0 : index
    %4 = vector.load %arg4[%c0_2, %c0_3] : memref<1x8xf32, #tpu.memory_space<vmem>>, vector<1x8xf32>
    %5 = arith.addf %3, %4 : vector<1x8xf32>
    %cst_4 = arith.constant 0.000000e+00 : f32
    %6 = vector.broadcast %cst_4 : f32 to vector<1x8xf32>
    %7 = arith.maximumf %5, %6 : vector<1x8xf32>
    %c0_5 = arith.constant 0 : index
    %c0_6 = arith.constant 0 : index
    %8 = vector.load %arg5[%c0_5, %c0_6] : memref<8x128xf32, #tpu.memory_space<vmem>>, vector<8x128xf32>
    %cst_7 = arith.constant dense<0.000000e+00> : vector<1x128xf32>
    %9 = tpu.matmul %7, %8, %cst_7 {dimension_numbers = #tpu.dot_dimension_numbers<[1], [0], [0], [1], [0, 0, 1, 1], [], []>} : vector<1x8xf32>, vector<8x128xf32>, vector<1x128xf32> -> vector<1x128xf32>
    %c0_8 = arith.constant 0 : index
    %c0_9 = arith.constant 0 : index
    %10 = vector.load %arg6[%c0_8, %c0_9] : memref<1x128xf32, #tpu.memory_space<vmem>>, vector<1x128xf32>
    %11 = arith.addf %9, %10 : vector<1x128xf32>
    %c0_10 = arith.constant 0 : index
    %c0_11 = arith.constant 0 : index
    %12 = vector.load %arg7[%c0_10, %c0_11] : memref<4x128xf32, #tpu.memory_space<vmem>>, vector<4x128xf32>
    %13 = vector.broadcast %11 : vector<1x128xf32> to vector<4x128xf32>
    %14 = arith.addf %12, %13 : vector<4x128xf32>
    %c0_12 = arith.constant 0 : index
    %c0_13 = arith.constant 0 : index
    %c0_14 = arith.constant 0 : index
    %15 = vector.load %arg8[%c0_12, %c0_13, %c0_14] : memref<4x1x128xf32, #tpu.memory_space<vmem>>, vector<4x1x128xf32>
    %c0_15 = arith.constant 0 : index
    %c0_16 = arith.constant 0 : index
    %c0_17 = arith.constant 0 : index
    %c0_18 = arith.constant 0 : index
    %16 = vector.load %arg10[%c0_15, %c0_16, %c0_17, %c0_18] : memref<1x4x16x128xf32, #tpu.memory_space<vmem>>, vector<1x4x1x128xf32>
    %17 = vector.shape_cast %16 : vector<1x4x1x128xf32> to vector<4x1x128xf32>
    %18 = vector.shape_cast %15 : vector<4x1x128xf32> to vector<1x4x1x128xf32>
    tpu.vector_store %arg10[%c0_15, %c0_16, %c0_17, %c0_18], %18 {strides = array<i32>} : memref<1x4x16x128xf32, #tpu.memory_space<vmem>>, vector<1x4x1x128xf32>,
    %19 = vector.shape_cast %14 : vector<4x128xf32> to vector<1x4x128xf32>
    %20 = vector.shape_cast %19 : vector<1x4x128xf32> to vector<1x4x128xf32>
    %21 = vector.broadcast %20 : vector<1x4x128xf32> to vector<4x4x128xf32>
    %c0_19 = arith.constant 0 : index
    %c0_20 = arith.constant 0 : index
    %c1 = arith.constant 1 : index
    %c0_21 = arith.constant 0 : index
    %22 = vector.load %arg10[%c0_19, %c0_20, %c1, %c0_21] : memref<1x4x16x128xf32, #tpu.memory_space<vmem>>, vector<1x4x4x128xf32>
    %23 = vector.shape_cast %22 : vector<1x4x4x128xf32> to vector<4x4x128xf32>
    %24 = vector.shape_cast %21 : vector<4x4x128xf32> to vector<1x4x4x128xf32>
    tpu.vector_store %arg10[%c0_19, %c0_20, %c1, %c0_21], %24 {strides = array<i32>} : memref<1x4x16x128xf32, #tpu.memory_space<vmem>>, vector<1x4x4x128xf32>,
    %c0_22 = arith.constant 0 : index
    %c0_23 = arith.constant 0 : index
    %c0_24 = arith.constant 0 : index
    %25 = vector.load %arg9[%c0_22, %c0_23, %c0_24] : memref<4x11x128xf32, #tpu.memory_space<vmem>>, vector<4x11x128xf32>
    %c0_25 = arith.constant 0 : index
    %c0_26 = arith.constant 0 : index
    %c5 = arith.constant 5 : index
    %c0_27 = arith.constant 0 : index
    %26 = vector.load %arg10[%c0_25, %c0_26, %c5, %c0_27] : memref<1x4x16x128xf32, #tpu.memory_space<vmem>>, vector<1x4x11x128xf32>
    %27 = vector.shape_cast %26 : vector<1x4x11x128xf32> to vector<4x11x128xf32>
    %28 = vector.shape_cast %25 : vector<4x11x128xf32> to vector<1x4x11x128xf32>
    tpu.vector_store %arg10[%c0_25, %c0_26, %c5, %c0_27], %28 {strides = array<i32>} : memref<1x4x16x128xf32, #tpu.memory_space<vmem>>, vector<1x4x11x128xf32>,
    return
  }
  func.func @transform_0(%arg0: i32, %arg1: i32) -> (i32, i32) {
    %c0_i32 = arith.constant 0 : i32
    %c0_i32_0 = arith.constant 0 : i32
    %c0_i32_1 = arith.constant 0 : i32
    return %c0_i32, %c0_i32_0 : i32, i32
  }
  func.func @transform_1(%arg0: i32, %arg1: i32) -> (i32, i32) {
    %c0_i32 = arith.constant 0 : i32
    %c0_i32_0 = arith.constant 0 : i32
    %c0_i32_1 = arith.constant 0 : i32
    return %c0_i32, %c0_i32_0 : i32, i32
  }
  func.func @transform_2(%arg0: i32, %arg1: i32) -> (i32, i32) {
    %c0_i32 = arith.constant 0 : i32
    %c0_i32_0 = arith.constant 0 : i32
    %c0_i32_1 = arith.constant 0 : i32
    return %c0_i32, %c0_i32_0 : i32, i32
  }
  func.func @transform_3(%arg0: i32, %arg1: i32) -> (i32, i32) {
    %c0_i32 = arith.constant 0 : i32
    %c0_i32_0 = arith.constant 0 : i32
    %c0_i32_1 = arith.constant 0 : i32
    return %c0_i32, %c0_i32_0 : i32, i32
  }
  func.func @transform_4(%arg0: i32, %arg1: i32) -> (i32, i32) {
    %c0_i32 = arith.constant 0 : i32
    %c0_i32_0 = arith.constant 0 : i32
    %c0_i32_1 = arith.constant 0 : i32
    return %c0_i32, %c0_i32_0 : i32, i32
  }
  func.func @transform_5(%arg0: i32, %arg1: i32) -> (i32, i32) {
    %c0_i32 = arith.constant 0 : i32
    %c0_i32_0 = arith.constant 0 : i32
    %c0_i32_1 = arith.constant 0 : i32
    return %c0_i32, %c0_i32_0 : i32, i32
  }
  func.func @transform_6(%arg0: i32, %arg1: i32) -> (i32, i32, i32) {
    %c0_i32 = arith.constant 0 : i32
    %c0_i32_0 = arith.constant 0 : i32
    %c0_i32_1 = arith.constant 0 : i32
    return %arg0, %c0_i32, %c0_i32_0 : i32, i32, i32
  }
  func.func @transform_7(%arg0: i32, %arg1: i32) -> (i32, i32, i32) {
    %c0_i32 = arith.constant 0 : i32
    %c0_i32_0 = arith.constant 0 : i32
    %c0_i32_1 = arith.constant 0 : i32
    return %arg0, %c0_i32, %c0_i32_0 : i32, i32, i32
  }
  func.func @transform_8(%arg0: i32, %arg1: i32) -> (i32, i32, i32, i32) {
    %c0_i32 = arith.constant 0 : i32
    %c0_i32_0 = arith.constant 0 : i32
    %c0_i32_1 = arith.constant 0 : i32
    return %arg1, %arg0, %c0_i32, %c0_i32_0 : i32, i32, i32, i32
  }
}

</mosaic_0001>

<llo_original>
// kernel: tpu_custom_call.1
$region0: #{tpu_custom_call.1}
  #allocation0 [shape = 'u32[]', space=smem, size = 0x4, offset = 0x4, fixed_abs, tag = 'smem constant byte address 0x4 - core index']
  #allocation1 [shape = 'u32[144,128]{1,0:T(1,128)}', space=vmem, size = 0x12000, scoped, tag = 'internal scratch']
  %s0 = inlined_call_operand.vmem [shape: f32[2,128], index: 0, kind: input, shape index: {}]
  %s1 = inlined_call_operand.vmem [shape: f32[128,8], index: 1, kind: input, shape index: {}]
  %s2 = inlined_call_operand.vmem [shape: f32[1,8], index: 2, kind: input, shape index: {}]
  %s3 = inlined_call_operand.vmem [shape: f32[8,128], index: 3, kind: input, shape index: {}]
  %s4 = inlined_call_operand.vmem [shape: f32[1,128], index: 4, kind: input, shape index: {}]
  %s5 = inlined_call_operand.vmem [shape: f32[4,128], index: 5, kind: input, shape index: {}]
  %s6 = inlined_call_operand.vmem [shape: f32[6,1,128], index: 6, kind: input, shape index: {}]
  %s7 = inlined_call_operand.vmem [shape: f32[6,11,128], index: 7, kind: input, shape index: {}]
  %s8 = inlined_call_operand.hbm [shape: f32[2,6,16,128], index: 8, kind: output, shape index: {}]
  %s9 = sld [smem:[#allocation0]]
  $region65: #{tpu_custom_call.1} parent=0
    _
  %s11 = ssub.s32 1, %s9
  %s12 = scalar_select 0, %s11, %s9
  $region1: #{tpu_custom_call.1} parent=0
    #allocation2 [shape = 'u8[65536]{0}', space=vmem, size = 0x10000, scoped, tag = 'output window, operand 0']
    #allocation3 [shape = 's32[2]{0}', space=sflag, size = 0x8, scoped, tag = 'scoped memory for tpu_custom_call.1']
    %13 = vsyncpa [#allocation3], 0
    %s14 = scalar_lea.sflag [#allocation3], 1
    %15 = vsyncpa %s14, 0
    loop: start=0, step=1, limit=6
    $region2: #{tpu_custom_call.1} parent=1 // loop_pre_header
      _
    $region3: #{tpu_custom_call.1} parent=1 // loop_header
      %s17 = sphi 0, %s21
      %p18 = scmp.ge.s32.totalorder %s17, 6
      %s24 = sphi 0, %s36
      %s25 = sphi 0, %s32
      %s26 = sphi 0, %s24
      %s27 = sphi 0, %s25
      %s28 = sphi 0, %s26
      %s29 = sphi 0, %s27
      %s37 = sphi 0, %s37
      %s39 = sphi 0, %s37
      %s40 = sphi 0, %s39
      %s54 = sphi 0, %s40
      %s58 = sphi 0, %s58
      %s60 = sphi 0, %s58
      %s61 = sphi 0, %s60
      %s75 = sphi 0, %s61
      %s79 = sphi 0, %s79
      %s81 = sphi 0, %s79
      %s82 = sphi 0, %s81
      %s96 = sphi 0, %s82
      %s100 = sphi 0, %s100
      %s102 = sphi 0, %s100
      %s103 = sphi 0, %s102
      %s117 = sphi 0, %s103
      %s121 = sphi 0, %s121
      %s123 = sphi 0, %s121
      %s124 = sphi 0, %s123
      %s138 = sphi 0, %s124
      %s142 = sphi 0, %s142
      %s144 = sphi 0, %s142
      %s145 = sphi 0, %s144
      %s159 = sphi 0, %s145
      %s165 = sphi 0, %s167
      %s168 = sphi 0, %s165
      %s169 = sphi 0, %s168
      %s185 = sphi 0, %s169
      %s191 = sphi 0, %s193
      %s194 = sphi 0, %s191
      %s195 = sphi 0, %s194
      %s211 = sphi 0, %s195
      %s219 = sphi 0, %s221
      %s222 = sphi 0, %s219
      %s223 = sphi 0, %s222
      %s239 = sphi 0, %s223
    $region4: #{tpu_custom_call.1} parent=1 // loop_header_branch
      %20 = sbr.rel (%p18) target = $region8
    $region5: #{tpu_custom_call.1} parent=1 // loop_body
      %s22 = ssub.s32 %s17, 1
      %s23 = ssub.s32 %s17, 2
      %s30 = sadd.s32 1, %s25
      %p31 = scmp.ge.s32.totalorder %s30, 2
      %s32 = scalar_select %p31, 0, %s30
      %s33 = sadd.s32 1, %s24
      %s34 = scalar_select %p31, %s33, %s24
      %p35 = scmp.ge.s32.totalorder %s34, 2
      %s36 = scalar_select %p35, 0, %s34
      %s38 = sadd.s32 %s37, 1
      %p41 = scmp.eq.s32.totalorder %s17, 3
      %p42 = scmp.ne.s32.totalorder %s37, %s39
      %p43 = scmp.eq.s32.totalorder %s17, 0
      %p44 = por %p42, %p43
      %p45 = scmp.ne.s32.totalorder %s37, %s39
      %p46 = scmp.eq.s32.totalorder %s22, 3
      %p47 = por %p45, %p46
      %p48 = scmp.ne.s32.totalorder %s39, %s40
      %p49 = scmp.eq.s32.totalorder %s22, 0
      %p50 = por %p48, %p49
      %p51 = scmp.ne.s32.totalorder %s39, %s40
      %p52 = scmp.eq.s32.totalorder %s23, 3
      %p53 = por %p51, %p52
      %p55 = scmp.ne.s32.totalorder %s40, %s54
      %p56 = scmp.eq.s32.totalorder %s23, 0
      %p57 = por %p55, %p56
      %s59 = sadd.s32 %s58, 1
      %p62 = scmp.eq.s32.totalorder %s17, 3
      %p63 = scmp.ne.s32.totalorder %s58, %s60
      %p64 = scmp.eq.s32.totalorder %s17, 0
      %p65 = por %p63, %p64
      %p66 = scmp.ne.s32.totalorder %s58, %s60
      %p67 = scmp.eq.s32.totalorder %s22, 3
      %p68 = por %p66, %p67
      %p69 = scmp.ne.s32.totalorder %s60, %s61
      %p70 = scmp.eq.s32.totalorder %s22, 0
      %p71 = por %p69, %p70
      %p72 = scmp.ne.s32.totalorder %s60, %s61
      %p73 = scmp.eq.s32.totalorder %s23, 3
      %p74 = por %p72, %p73
      %p76 = scmp.ne.s32.totalorder %s61, %s75
      %p77 = scmp.eq.s32.totalorder %s23, 0
      %p78 = por %p76, %p77
      %s80 = sadd.s32 %s79, 1
      %p83 = scmp.eq.s32.totalorder %s17, 3
      %p84 = scmp.ne.s32.totalorder %s79, %s81
      %p85 = scmp.eq.s32.totalorder %s17, 0
      %p86 = por %p84, %p85
      %p87 = scmp.ne.s32.totalorder %s79, %s81
      %p88 = scmp.eq.s32.totalorder %s22, 3
      %p89 = por %p87, %p88
      %p90 = scmp.ne.s32.totalorder %s81, %s82
      %p91 = scmp.eq.s32.totalorder %s22, 0
      %p92 = por %p90, %p91
      %p93 = scmp.ne.s32.totalorder %s81, %s82
      %p94 = scmp.eq.s32.totalorder %s23, 3
      %p95 = por %p93, %p94
      %p97 = scmp.ne.s32.totalorder %s82, %s96
      %p98 = scmp.eq.s32.totalorder %s23, 0
      %p99 = por %p97, %p98
      %s101 = sadd.s32 %s100, 1
      %p104 = scmp.eq.s32.totalorder %s17, 3
      %p105 = scmp.ne.s32.totalorder %s100, %s102
      %p106 = scmp.eq.s32.totalorder %s17, 0
      %p107 = por %p105, %p106
      %p108 = scmp.ne.s32.totalorder %s100, %s102
      %p109 = scmp.eq.s32.totalorder %s22, 3
      %p110 = por %p108, %p109
      %p111 = scmp.ne.s32.totalorder %s102, %s103
      %p112 = scmp.eq.s32.totalorder %s22, 0
      %p113 = por %p111, %p112
      %p114 = scmp.ne.s32.totalorder %s102, %s103
      %p115 = scmp.eq.s32.totalorder %s23, 3
      %p116 = por %p114, %p115
      %p118 = scmp.ne.s32.totalorder %s103, %s117
      %p119 = scmp.eq.s32.totalorder %s23, 0
      %p120 = por %p118, %p119
      %s122 = sadd.s32 %s121, 1
      %p125 = scmp.eq.s32.totalorder %s17, 3
      %p126 = scmp.ne.s32.totalorder %s121, %s123
      %p127 = scmp.eq.s32.totalorder %s17, 0
      %p128 = por %p126, %p127
      %p129 = scmp.ne.s32.totalorder %s121, %s123
      %p130 = scmp.eq.s32.totalorder %s22, 3
      %p131 = por %p129, %p130
      %p132 = scmp.ne.s32.totalorder %s123, %s124
      %p133 = scmp.eq.s32.totalorder %s22, 0
      %p134 = por %p132, %p133
      %p135 = scmp.ne.s32.totalorder %s123, %s124
      %p136 = scmp.eq.s32.totalorder %s23, 3
      %p137 = por %p135, %p136
      %p139 = scmp.ne.s32.totalorder %s124, %s138
      %p140 = scmp.eq.s32.totalorder %s23, 0
      %p141 = por %p139, %p140
      %s143 = sadd.s32 %s142, 1
      %p146 = scmp.eq.s32.totalorder %s17, 3
      %p147 = scmp.ne.s32.totalorder %s142, %s144
      %p148 = scmp.eq.s32.totalorder %s17, 0
      %p149 = por %p147, %p148
      %p150 = scmp.ne.s32.totalorder %s142, %s144
      %p151 = scmp.eq.s32.totalorder %s22, 3
      %p152 = por %p150, %p151
      %p153 = scmp.ne.s32.totalorder %s144, %s145
      %p154 = scmp.eq.s32.totalorder %s22, 0
      %p155 = por %p153, %p154
      %p156 = scmp.ne.s32.totalorder %s144, %s145
      %p157 = scmp.eq.s32.totalorder %s23, 3
      %p158 = por %p156, %p157
      %p160 = scmp.ne.s32.totalorder %s145, %s159
      %p161 = scmp.eq.s32.totalorder %s23, 0
      %p162 = por %p160, %p161
      %s163 = ssub.s32 %s24, %s36
      %p164 = scmp.eq.s32.totalorder %s163, 0
      %s166 = sadd.s32 %s165, 1
      %s167 = scalar_select %p164, %s165, %s166
      %p170 = pneg %p164
      %p171 = scmp.eq.s32.totalorder %s17, 3
      %p172 = por %p170, %p171
      %p173 = scmp.ne.s32.totalorder %s165, %s168
      %p174 = scmp.eq.s32.totalorder %s17, 0
      %p175 = por %p173, %p174
      %p176 = scmp.ne.s32.totalorder %s165, %s168
      %p177 = scmp.eq.s32.totalorder %s22, 3
      %p178 = por %p176, %p177
      %p179 = scmp.ne.s32.totalorder %s168, %s169
      %p180 = scmp.eq.s32.totalorder %s22, 0
      %p181 = por %p179, %p180
      %p182 = scmp.ne.s32.totalorder %s168, %s169
      %p183 = scmp.eq.s32.totalorder %s23, 3
      %p184 = por %p182, %p183
      %p186 = scmp.ne.s32.totalorder %s169, %s185
      %p187 = scmp.eq.s32.totalorder %s23, 0
      %p188 = por %p186, %p187
      %s189 = ssub.s32 %s24, %s36
      %p190 = scmp.eq.s32.totalorder %s189, 0
      %s192 = sadd.s32 %s191, 1
      %s193 = scalar_select %p190, %s191, %s192
      %p196 = pneg %p190
      %p197 = scmp.eq.s32.totalorder %s17, 3
      %p198 = por %p196, %p197
      %p199 = scmp.ne.s32.totalorder %s191, %s194
      %p200 = scmp.eq.s32.totalorder %s17, 0
      %p201 = por %p199, %p200
      %p202 = scmp.ne.s32.totalorder %s191, %s194
      %p203 = scmp.eq.s32.totalorder %s22, 3
      %p204 = por %p202, %p203
      %p205 = scmp.ne.s32.totalorder %s194, %s195
      %p206 = scmp.eq.s32.totalorder %s22, 0
      %p207 = por %p205, %p206
      %p208 = scmp.ne.s32.totalorder %s194, %s195
      %p209 = scmp.eq.s32.totalorder %s23, 3
      %p210 = por %p208, %p209
      %p212 = scmp.ne.s32.totalorder %s195, %s211
      %p213 = scmp.eq.s32.totalorder %s23, 0
      %p214 = por %p212, %p213
      %s215 = ssub.s32 %s25, %s32
      %s216 = ssub.s32 %s24, %s36
      %s217 = sor.u32 %s215, %s216
      %p218 = scmp.eq.s32.totalorder %s217, 0
      %s220 = sadd.s32 %s219, 1
      %s221 = scalar_select %p218, %s219, %s220
      %p224 = pneg %p218
      %p225 = scmp.eq.s32.totalorder %s17, 3
      %p226 = por %p224, %p225
      %p227 = scmp.ne.s32.totalorder %s219, %s222
      %p228 = scmp.eq.s32.totalorder %s17, 0
      %p229 = por %p227, %p228
      %p230 = scmp.ne.s32.totalorder %s219, %s222
      %p231 = scmp.eq.s32.totalorder %s22, 3
      %p232 = por %p230, %p231
      %p233 = scmp.ne.s32.totalorder %s222, %s223
      %p234 = scmp.eq.s32.totalorder %s22, 0
      %p235 = por %p233, %p234
      %p236 = scmp.ne.s32.totalorder %s222, %s223
      %p237 = scmp.eq.s32.totalorder %s23, 3
      %p238 = por %p236, %p237
      %p240 = scmp.ne.s32.totalorder %s223, %s239
      %p241 = scmp.eq.s32.totalorder %s23, 0
      %p242 = por %p240, %p241
      %p243 = scmp.le.s32.totalorder 1, %s17
      %p244 = scmp.lt.s32.totalorder %s17, 5
      %p245 = pnand %p243, %p244
      %p246 = pneg %p245
      // Predicated region
      $region9: #{tpu_custom_call.1} parent=5 // pred_check
        _
      $region10: #{tpu_custom_call.1} parent=5 // pred_check_branch
        %248 = sbr.rel (%p245) target = $region12
      $region11: #{tpu_custom_call.1} parent=5 // pred_region
        %s249 = ssub.s32 %s17, 1
        // Predicated region
        $region13: #{tpu_custom_call.1} parent=11 // pred_check
          %p250 = pneg %p50
        $region14: #{tpu_custom_call.1} parent=11 // pred_check_branch
          %252 = sbr.rel (%p250) target = $region16
        $region15: #{tpu_custom_call.1} parent=11 // pred_region
          _
        $region16: #{tpu_custom_call.1} parent=11 // pred_fallthru
          _
        // Predicated region
        $region17: #{tpu_custom_call.1} parent=11 // pred_check
          %p253 = pneg %p71
        $region18: #{tpu_custom_call.1} parent=11 // pred_check_branch
          %255 = sbr.rel (%p253) target = $region20
        $region19: #{tpu_custom_call.1} parent=11 // pred_region
          _
        $region20: #{tpu_custom_call.1} parent=11 // pred_fallthru
          _
        // Predicated region
        $region21: #{tpu_custom_call.1} parent=11 // pred_check
          %p256 = pneg %p92
        $region22: #{tpu_custom_call.1} parent=11 // pred_check_branch
          %258 = sbr.rel (%p256) target = $region24
        $region23: #{tpu_custom_call.1} parent=11 // pred_region
          _
        $region24: #{tpu_custom_call.1} parent=11 // pred_fallthru
          _
        // Predicated region
        $region25: #{tpu_custom_call.1} parent=11 // pred_check
          %p259 = pneg %p113
        $region26: #{tpu_custom_call.1} parent=11 // pred_check_branch
          %261 = sbr.rel (%p259) target = $region28
        $region27: #{tpu_custom_call.1} parent=11 // pred_region
          _
        $region28: #{tpu_custom_call.1} parent=11 // pred_fallthru
          _
        // Predicated region
        $region29: #{tpu_custom_call.1} parent=11 // pred_check
          %p262 = pneg %p134
        $region30: #{tpu_custom_call.1} parent=11 // pred_check_branch
          %264 = sbr.rel (%p262) target = $region32
        $region31: #{tpu_custom_call.1} parent=11 // pred_region
          _
        $region32: #{tpu_custom_call.1} parent=11 // pred_fallthru
          _
        // Predicated region
        $region33: #{tpu_custom_call.1} parent=11 // pred_check
          %p265 = pneg %p155
        $region34: #{tpu_custom_call.1} parent=11 // pred_check_branch
          %267 = sbr.rel (%p265) target = $region36
        $region35: #{tpu_custom_call.1} parent=11 // pred_region
          _
        $region36: #{tpu_custom_call.1} parent=11 // pred_fallthru
          _
      $region12: #{tpu_custom_call.1} parent=5 // pred_fallthru
        _
      %p268 = scmp.lt.s32.totalorder %s17, 4
      // Predicated region
      $region37: #{tpu_custom_call.1} parent=5 // pred_check
        %p269 = pneg %p268
      $region38: #{tpu_custom_call.1} parent=5 // pred_check_branch
        %271 = sbr.rel (%p269) target = $region40
      $region39: #{tpu_custom_call.1} parent=5 // pred_region
        // Predicated region
        $region41: #{tpu_custom_call.1} parent=39 // pred_check
          %p272 = pneg %p175
        $region42: #{tpu_custom_call.1} parent=39 // pred_check_branch
          %274 = sbr.rel (%p272) target = $region44
        $region43: #{tpu_custom_call.1} parent=39 // pred_region
          %s275 = smul.u32 4, %s24
          %s276 = ssub.s32 6, %s275
          %p277 = scmp.lt.s32.totalorder %s276, 4
          %s278 = scalar_select %p277, %s276, 4
          %s279 = smul.u32 16, %s278
          %p280 = scmp.lt.s32.totalorder %s275, 5
          %s281 = scalar_select %p280, %s275, 5
          %s282 = scalar_lea.vmem %s6, %s281
          %s283 = smul.u32 4, %s24
          %s284 = ssub.s32 6, %s283
          %p285 = scmp.lt.s32.totalorder %s284, 4
          %s286 = scalar_select %p285, %s284, 4
          %s287 = smul.u32 16, %s286
        $region44: #{tpu_custom_call.1} parent=39 // pred_fallthru
          _
        // Predicated region
        $region45: #{tpu_custom_call.1} parent=39 // pred_check
          %p288 = pneg %p201
        $region46: #{tpu_custom_call.1} parent=39 // pred_check_branch
          %290 = sbr.rel (%p288) target = $region48
        $region47: #{tpu_custom_call.1} parent=39 // pred_region
          %s291 = smul.u32 4, %s24
          %s292 = ssub.s32 6, %s291
          %p293 = scmp.lt.s32.totalorder %s292, 4
          %s294 = scalar_select %p293, %s292, 4
          %s295 = smul.u32 128, %s294
          %s296 = smul.u32 %s295, 2
          %p297 = scmp.lt.s32.totalorder %s291, 5
          %s298 = scalar_select %p297, %s291, 5
          %s299 = smul.addr %s298, 2
          %s300 = smul.addr %s299, 8
          %s301 = scalar_lea.vmem %s7, %s300
          %s302 = smul.u32 4, %s24
          %s303 = ssub.s32 6, %s302
          %p304 = scmp.lt.s32.totalorder %s303, 4
          %s305 = scalar_select %p304, %s303, 4
          %s306 = smul.u32 128, %s305
          %s307 = smul.u32 %s306, 2
        $region48: #{tpu_custom_call.1} parent=39 // pred_fallthru
          _
      $region40: #{tpu_custom_call.1} parent=5 // pred_fallthru
        _
      %p308 = scmp.le.s32.totalorder 1, %s17
      %p309 = scmp.lt.s32.totalorder %s17, 5
      %p310 = pnand %p308, %p309
      %p311 = pneg %p310
      // Predicated region
      $region49: #{tpu_custom_call.1} parent=5 // pred_check
        _
      $region50: #{tpu_custom_call.1} parent=5 // pred_check_branch
        %313 = sbr.rel (%p310) target = $region52
      $region51: #{tpu_custom_call.1} parent=5 // pred_region
        %s314 = ssub.s32 %s17, 1
        %p315 = pneg %p50
        %p316 = pneg %p47
        %p317 = pneg %p71
        %p318 = pneg %p68
        %p319 = pneg %p92
        %p320 = pneg %p89
        %p321 = pneg %p113
        %p322 = pneg %p110
        %p323 = pneg %p134
        %p324 = pneg %p131
        %p325 = pneg %p155
        %p326 = pneg %p152
        %s327 = smul.u32 4, %s26
        %s328 = ssub.s32 6, %s327
        %p329 = scmp.lt.s32.totalorder %s328, 4
        %s330 = scalar_select %p329, %s328, 4
        %s331 = smul.u32 16, %s330
        %p332 = scmp.lt.s32.totalorder %s327, 5
        %s333 = scalar_select %p332, %s327, 5
        %s334 = scalar_lea.vmem %s6, %s333
        %p335 = pneg %p181
        %p336 = pneg %p178
        %s337 = smul.u32 4, %s26
        %s338 = ssub.s32 6, %s337
        %p339 = scmp.lt.s32.totalorder %s338, 4
        %s340 = scalar_select %p339, %s338, 4
        %s341 = smul.u32 128, %s340
        %s342 = smul.u32 %s341, 2
        %p343 = scmp.lt.s32.totalorder %s337, 5
        %s344 = scalar_select %p343, %s337, 5
        %s345 = smul.addr %s344, 2
        %s346 = smul.addr %s345, 8
        %s347 = scalar_lea.vmem %s7, %s346
        %p348 = pneg %p207
        %p349 = pneg %p204
        %p350 = pneg %p235
        %p351 = pneg %p232
        %s352 = sand.u32 %s222, 1
        %s353 = scalar_lea.sflag [#allocation3], %s352
        %s354 = sand.u32 %s222, 1
        %s355 = smul.addr %s354, 64
        %s356 = scalar_lea.vmem [#allocation2], %s355
        %s357 = smul.u32 4, %s26
        %s358 = ssub.s32 6, %s357
        %p359 = scmp.lt.s32.totalorder %s358, 4
        %s360 = scalar_select %p359, %s358, 4
        %s361 = smul.u32 16, %s360
        %p362 = scmp.lt.s32.totalorder %s357, 5
        %s363 = scalar_select %p362, %s357, 5
        %s364 = scalar_lea.vmem %s6, %s363
        %s365 = smul.u32 4, %s26
        %s366 = ssub.s32 6, %s365
        %p367 = scmp.lt.s32.totalorder %s366, 4
        %s368 = scalar_select %p367, %s366, 4
        %s369 = smul.u32 16, %s368
        %s370 = smul.u32 4, %s26
        %s371 = ssub.s32 6, %s370
        %p372 = scmp.lt.s32.totalorder %s371, 4
        %s373 = scalar_select %p372, %s371, 4
        %s374 = smul.u32 128, %s373
        %s375 = smul.u32 %s374, 2
        %p376 = scmp.lt.s32.totalorder %s370, 5
        %s377 = scalar_select %p376, %s370, 5
        %s378 = smul.addr %s377, 2
        %s379 = smul.addr %s378, 8
        %s380 = scalar_lea.vmem %s7, %s379
        %s381 = smul.u32 4, %s26
        %s382 = ssub.s32 6, %s381
        %p383 = scmp.lt.s32.totalorder %s382, 4
        %s384 = scalar_select %p383, %s382, 4
        %s385 = smul.u32 128, %s384
        %s386 = smul.u32 %s385, 2
        %s387 = smul.u32 4, %s26
        %s388 = ssub.s32 6, %s387
        %p389 = scmp.lt.s32.totalorder %s388, 4
        %s390 = scalar_select %p389, %s388, 4
        %s391 = smul.u32 128, %s390
        %s392 = smul.u32 %s391, 2
        %s393 = scalar_lea.vmem %s0, %s27
        %v394 = vld [vmem:[%s393] sm:$0x1]
        %v395 = vld [vmem:[%s1] sm:$0xff]
        %v396 = vld [vmem:[%s1 + $0x8] sm:$0xff]
        %v397 = vld [vmem:[%s1 + $0x10] sm:$0xff]
        %v398 = vld [vmem:[%s1 + $0x18] sm:$0xff]
        %v399 = vld [vmem:[%s1 + $0x20] sm:$0xff]
        %v400 = vld [vmem:[%s1 + $0x28] sm:$0xff]
        %v401 = vld [vmem:[%s1 + $0x30] sm:$0xff]
        %v402 = vld [vmem:[%s1 + $0x38] sm:$0xff]
        %v403 = vld [vmem:[%s1 + $0x40] sm:$0xff]
        %v404 = vld [vmem:[%s1 + $0x48] sm:$0xff]
        %v405 = vld [vmem:[%s1 + $0x50] sm:$0xff]
        %v406 = vld [vmem:[%s1 + $0x58] sm:$0xff]
        %v407 = vld [vmem:[%s1 + $0x60] sm:$0xff]
        %v408 = vld [vmem:[%s1 + $0x68] sm:$0xff]
        %v409 = vld [vmem:[%s1 + $0x70] sm:$0xff]
        %v410 = vld [vmem:[%s1 + $0x78] sm:$0xff]
        %v411 = vld [vmem:[%s2] sm:$0x1]
        %412 = vmatprep.subr.mxu0 0.0
        %413 = vmatpush1.msra.mxu0 %v395
        %414 = vmatprep.subr.mxu0 0.0
        %415 = vmatpush1.msra.mxu0 %v396
        %416 = vmatprep.subr.mxu0 0.0
        %417 = vmatpush1.msra.mxu0 %v397
        %418 = vmatprep.subr.mxu0 0.0
        %419 = vmatpush1.msra.mxu0 %v398
        %420 = vmatprep.subr.mxu0 0.0
        %421 = vmatpush1.msra.mxu0 %v399
        %422 = vmatprep.subr.mxu0 0.0
        %423 = vmatpush1.msra.mxu0 %v400
        %424 = vmatprep.subr.mxu0 0.0
        %425 = vmatpush1.msra.mxu0 %v401
        %426 = vmatprep.subr.mxu0 0.0
        %427 = vmatpush1.msra.mxu0 %v402
        %428 = vmatprep.subr.mxu0 0.0
        %429 = vmatpush1.msra.mxu0 %v403
        %430 = vmatprep.subr.mxu0 0.0
        %431 = vmatpush1.msra.mxu0 %v404
        %432 = vmatprep.subr.mxu0 0.0
        %433 = vmatpush1.msra.mxu0 %v405
        %434 = vmatprep.subr.mxu0 0.0
        %435 = vmatpush1.msra.mxu0 %v406
        %436 = vmatprep.subr.mxu0 0.0
        %437 = vmatpush1.msra.mxu0 %v407
        %438 = vmatprep.subr.mxu0 0.0
        %439 = vmatpush1.msra.mxu0 %v408
        %440 = vmatprep.subr.mxu0 0.0
        %441 = vmatpush1.msra.mxu0 %v409
        %442 = vmatprep.subr.mxu0 0.0
        %443 = vmatpush1.msra.mxu0 %v410
        %444 = vmatprep.subr.mxu0 0.0
        %445 = vmatpush1.msra.mxu0 0.0
        %446 = vmatprep.subr.mxu0 0.0
        %447 = vmatpush1.msra.mxu0 0.0
        %448 = vmatprep.subr.mxu0 0.0
        %449 = vmatpush1.msra.mxu0 0.0
        %450 = vmatprep.subr.mxu0 0.0
        %451 = vmatpush1.msra.mxu0 0.0
        %452 = vmatprep.subr.mxu0 0.0
        %453 = vmatpush1.msra.mxu0 0.0
        %454 = vmatprep.subr.mxu0 0.0
        %455 = vmatpush1.msra.mxu0 0.0
        %456 = vmatprep.subr.mxu0 0.0
        %457 = vmatpush1.msra.mxu0 0.0
        %458 = vmatprep.subr.mxu0 0.0
        %459 = vmatpush1.msra.mxu0 0.0
        %460 = vmatprep.subr.mxu0 0.0
        %461 = vmatpush1.msra.mxu0 0.0
        %462 = vmatprep.subr.mxu0 0.0
        %463 = vmatpush1.msra.mxu0 0.0
        %464 = vmatprep.subr.mxu0 0.0
        %465 = vmatpush1.msra.mxu0 0.0
        %466 = vmatprep.subr.mxu0 0.0
        %467 = vmatpush1.msra.mxu0 0.0
        %468 = vmatprep.subr.mxu0 0.0
        %469 = vmatpush1.msra.mxu0 0.0
        %470 = vmatprep.subr.mxu0 0.0
        %471 = vmatpush1.msra.mxu0 0.0
        %472 = vmatprep.subr.mxu0 0.0
        %473 = vmatpush1.msra.mxu0 0.0
        %474 = vmatprep.subr.mxu0 0.0
        %475 = vmatpush1.msra.mxu0 0.0
        %476 = vmatprep.mubr.f32.mxu0 0.0
        %477 = vmatmul.mubr.f32.gmra.mrb[0].mxu0 %v394
        %v478 = vpop.f32.mrb[0].mxu0
        %v479 = vadd.f32 %v411, %v478
        %v480 = vpop.f32.mrb[0].mxu0
        %481 = vdwg.mxu0
        %v482 = vmax.f32 %v479, 0.0
        %v483 = vld [vmem:[%s3] sm:$0xff]
        %v484 = vld [vmem:[%s4] sm:$0x1]
        %vm485 = vcmask 64512
        %v487 = vsel %vm485, %v482, 0
        %489 = vmatprep.subr.mxu0 0.0
        %490 = vmatpush1.msra.mxu0 %v483
        %491 = vmatprep.subr.mxu0 0.0
        %492 = vmatpush1.msra.mxu0 0.0
        %493 = vmatprep.subr.mxu0 0.0
        %494 = vmatpush1.msra.mxu0 0.0
        %495 = vmatprep.subr.mxu0 0.0
        %496 = vmatpush1.msra.mxu0 0.0
        %497 = vmatprep.subr.mxu0 0.0
        %498 = vmatpush1.msra.mxu0 0.0
        %499 = vmatprep.subr.mxu0 0.0
        %500 = vmatpush1.msra.mxu0 0.0
        %501 = vmatprep.subr.mxu0 0.0
        %502 = vmatpush1.msra.mxu0 0.0
        %503 = vmatprep.subr.mxu0 0.0
        %504 = vmatpush1.msra.mxu0 0.0
        %505 = vmatprep.subr.mxu0 0.0
        %506 = vmatpush1.msra.mxu0 0.0
        %507 = vmatprep.subr.mxu0 0.0
        %508 = vmatpush1.msra.mxu0 0.0
        %509 = vmatprep.subr.mxu0 0.0
        %510 = vmatpush1.msra.mxu0 0.0
        %511 = vmatprep.subr.mxu0 0.0
        %512 = vmatpush1.msra.mxu0 0.0
        %513 = vmatprep.subr.mxu0 0.0
        %514 = vmatpush1.msra.mxu0 0.0
        %515 = vmatprep.subr.mxu0 0.0
        %516 = vmatpush1.msra.mxu0 0.0
        %517 = vmatprep.subr.mxu0 0.0
        %518 = vmatpush1.msra.mxu0 0.0
        %519 = vmatprep.subr.mxu0 0.0
        %520 = vmatpush1.msra.mxu0 0.0
        %521 = vmatprep.subr.mxu0 0.0
        %522 = vmatpush1.msra.mxu0 0.0
        %523 = vmatprep.subr.mxu0 0.0
        %524 = vmatpush1.msra.mxu0 0.0
        %525 = vmatprep.subr.mxu0 0.0
        %526 = vmatpush1.msra.mxu0 0.0
        %527 = vmatprep.subr.mxu0 0.0
        %528 = vmatpush1.msra.mxu0 0.0
        %529 = vmatprep.subr.mxu0 0.0
        %530 = vmatpush1.msra.mxu0 0.0
        %531 = vmatprep.subr.mxu0 0.0
        %532 = vmatpush1.msra.mxu0 0.0
        %533 = vmatprep.subr.mxu0 0.0
        %534 = vmatpush1.msra.mxu0 0.0
        %535 = vmatprep.subr.mxu0 0.0
        %536 = vmatpush1.msra.mxu0 0.0
        %537 = vmatprep.subr.mxu0 0.0
        %538 = vmatpush1.msra.mxu0 0.0
        %539 = vmatprep.subr.mxu0 0.0
        %540 = vmatpush1.msra.mxu0 0.0
        %541 = vmatprep.subr.mxu0 0.0
        %542 = vmatpush1.msra.mxu0 0.0
        %543 = vmatprep.subr.mxu0 0.0
        %544 = vmatpush1.msra.mxu0 0.0
        %545 = vmatprep.subr.mxu0 0.0
        %546 = vmatpush1.msra.mxu0 0.0
        %547 = vmatprep.subr.mxu0 0.0
        %548 = vmatpush1.msra.mxu0 0.0
        %549 = vmatprep.subr.mxu0 0.0
        %550 = vmatpush1.msra.mxu0 0.0
        %551 = vmatprep.subr.mxu0 0.0
        %552 = vmatpush1.msra.mxu0 0.0
        %553 = vmatprep.mubr.f32.mxu0 0.0
        %554 = vmatmul.mubr.f32.gmra.mrb[0].mxu0 %v487
        %v555 = vpop.f32.mrb[0].mxu0
        %v556 = vadd.f32 %v484, %v555
        %v557 = vpop.f32.mrb[0].mxu0
        %558 = vdwg.mxu0
        %v559 = vld [vmem:[%s5] sm:$0xf]
        %v560 = vlaneseq
        %v561 = vshrl.u32 %v560, 7
        %v562 = vsub.s32 0, %v561
        %v563 = vrot.slane %v556, %v562
        %v564 = vadd.f32 %v559, %v563
        %v565 = vld [vmem:[%s364] sm:$0x1]
        %v566 = vld [vmem:[%s364 + $0x1] sm:$0x1]
        %v567 = vld [vmem:[%s364 + $0x2] sm:$0x1]
        %v568 = vld [vmem:[%s364 + $0x3] sm:$0x1]
        %569 = vst [vmem:[%s356] sm:$0x1] %v565
        %570 = vst [vmem:[%s356 + $0x10] sm:$0x1] %v566
        %571 = vst [vmem:[%s356 + $0x20] sm:$0x1] %v567
        %572 = vst [vmem:[%s356 + $0x30] sm:$0x1] %v568
        %573 = vst [vmem:[%s356 + $0x1] sm:$0xf] %v564
        %574 = vst [vmem:[%s356 + $0x11] sm:$0xf] %v564
        %575 = vst [vmem:[%s356 + $0x21] sm:$0xf] %v564
        %576 = vst [vmem:[%s356 + $0x31] sm:$0xf] %v564
        %v577 = vld [vmem:[%s380] sm:$0xff]
        %v578 = vld [vmem:[%s380 + $0x8] sm:$0x7]
        %v579 = vld [vmem:[%s380 + $0x10] sm:$0xff]
        %v580 = vld [vmem:[%s380 + $0x18] sm:$0x7]
        %v581 = vld [vmem:[%s380 + $0x20] sm:$0xff]
        %v582 = vld [vmem:[%s380 + $0x28] sm:$0x7]
        %v583 = vld [vmem:[%s380 + $0x30] sm:$0xff]
        %v584 = vld [vmem:[%s380 + $0x38] sm:$0x7]
        %585 = vst [vmem:[%s356 + $0x5] sm:$0xff] %v577
        %586 = vst [vmem:[%s356 + $0xd] sm:$0x7] %v578
        %587 = vst [vmem:[%s356 + $0x15] sm:$0xff] %v579
        %588 = vst [vmem:[%s356 + $0x1d] sm:$0x7] %v580
        %589 = vst [vmem:[%s356 + $0x25] sm:$0xff] %v581
        %590 = vst [vmem:[%s356 + $0x2d] sm:$0x7] %v582
        %591 = vst [vmem:[%s356 + $0x35] sm:$0xff] %v583
        %592 = vst [vmem:[%s356 + $0x3d] sm:$0x7] %v584
        %s593 = sand.u32 %s222, 1
        %s594 = scalar_lea.sflag [#allocation3], %s593
        %s595 = sand.u32 %s222, 1
        %s596 = smul.addr %s595, 64
        %s597 = scalar_lea.vmem [#allocation2], %s596
        // Predicated region
        $region53: #{tpu_custom_call.1} parent=51 // pred_check
          %p598 = pneg %p232
        $region54: #{tpu_custom_call.1} parent=51 // pred_check_branch
          %600 = sbr.rel (%p598) target = $region56
        $region55: #{tpu_custom_call.1} parent=51 // pred_region
          %s601 = smul.u32 4, %s26
          %s602 = ssub.s32 6, %s601
          %p603 = scmp.lt.s32.totalorder %s602, 4
          %s604 = scalar_select %p603, %s602, 4
          %s605 = smul.u32 128, %s604
          %s606 = smul.u32 %s605, 2
          %s608 = ssub.s32 1024, %s606
          %609 = vsyncadd %s594, %s608
          %p610 = scmp.ne.s32.totalorder 0, %s606
          %s611 = smul.addr %s601, 2
          %s612 = smul.addr %s27, 12
          %s613 = sadd.s32 %s611, %s612
          %s614 = smul.addr %s613, 128
          %s615 = scalar_lea.hbm %s8, %s614
          %s616 = smul.u32 %s604, 2
          %s617 = smul.u32 8, %s616
          %s618 = sshll.u32 %s597, 4
          %s619 = int_to_ptr.vmem [resolvable:$true] %s618
          %s620 = sshll.u32 %s617, 4
          %624 = dma.vmem_to_hbm [thread:$0]  (%p610), %s619, %s620, %s615, %s594, 128, 128, 8
        $region56: #{tpu_custom_call.1} parent=51 // pred_fallthru
          _
      $region52: #{tpu_custom_call.1} parent=5 // pred_fallthru
        _
      %p625 = scmp.le.s32.totalorder 2, %s17
      // Predicated region
      $region57: #{tpu_custom_call.1} parent=5 // pred_check
        %p626 = pneg %p625
      $region58: #{tpu_custom_call.1} parent=5 // pred_check_branch
        %628 = sbr.rel (%p626) target = $region60
      $region59: #{tpu_custom_call.1} parent=5 // pred_region
        %s629 = ssub.s32 %s17, 2
        // Predicated region
        $region61: #{tpu_custom_call.1} parent=59 // pred_check
          %p630 = pneg %p238
        $region62: #{tpu_custom_call.1} parent=59 // pred_check_branch
          %632 = sbr.rel (%p630) target = $region64
        $region63: #{tpu_custom_call.1} parent=59 // pred_region
          %s633 = sand.u32 %s223, 1
          %s634 = scalar_lea.sflag [#allocation3], %s633
          %s635 = sand.u32 %s223, 1
          %s636 = smul.addr %s635, 64
          %s637 = scalar_lea.vmem [#allocation2], %s636
          %638 = dma.done %s634, 1024
        $region64: #{tpu_custom_call.1} parent=59 // pred_fallthru
          _
      $region60: #{tpu_custom_call.1} parent=5 // pred_fallthru
        _
    $region6: #{tpu_custom_call.1} parent=1 // loop_footer
      %s21 = sadd.s32 1, %s17
    $region7: #{tpu_custom_call.1} parent=1 // loop_footer_branch
      %16 = sbr.rel target = $region3
    $region8: #{tpu_custom_call.1} parent=1 // loop_exit
      _
    %639 = vsyncpa [#allocation3], 1
    %s640 = scalar_lea.sflag [#allocation3], 1
    %641 = vsyncpa %s640, 1

</llo_original>
